<compile_context>
chip_gen: v7x
topology: tpu7x:2x2x1
jax: 0.10.0
libtpu: 0.0.40
codegen_flags: <defaults>
</compile_context>

<pallas_src>
import jax
import jax.numpy as jnp
from jax.experimental import pallas as pl
from jax.experimental.pallas import tpu as pltpu

IN_DIM = 8
HID_DIM = 16
OUT_DIM = 32

PACK = 16                  # original rows packed per lane-dense row (16 * 8 = 128 lanes)
TILE_P = 1024              # packed rows per grid step (= 16384 original rows); sweepable

P_IN = PACK * IN_DIM       # 128
P_HID = PACK * HID_DIM     # 256
P_OUT = PACK * OUT_DIM     # 512


def _mlp_kernel(x_ref, w1_ref, b1_ref, w2_ref, b2_ref, o_ref):
    # x_ref: (tile_p, 128), w1: (128, 256), b1: (1, 256), w2: (256, 512), b2: (1, 512)
    cdt = w1_ref.dtype                       # compute dtype for the MXU (f32 or bf16)
    x = x_ref[...].astype(cdt)
    h = jnp.dot(x, w1_ref[...], preferred_element_type=jnp.float32) + b1_ref[...]
    h = jnp.maximum(h, 0.0)
    y = jnp.dot(h.astype(cdt), w2_ref[...], preferred_element_type=jnp.float32) + b2_ref[...]
    o_ref[...] = jnp.maximum(y, 0.0).astype(o_ref.dtype)


def _block_diag(w, copies):
    """(a, b) -> (copies*a, copies*b) block-diagonal with `w` repeated on the diagonal."""
    a, b = w.shape
    eye = jnp.eye(copies, dtype=w.dtype)
    return (eye[:, None, :, None] * w[None, :, None, :]).reshape(copies * a, copies * b)


def expand_params(w1, b1, w2, b2, *, compute_dtype=jnp.float32):
    """One-time expansion of the tiny MLP params into lane-dense block-diagonal form.

    Call this ONCE (outside the hot loop) and pass the result to
    `feature_expansion_mlp`.  Weights are stored in `compute_dtype` (the MXU
    input dtype); biases stay f32 (they are added to the f32 accumulators).
    """
    return {
        "w1": w1, "b1": b1, "w2": w2, "b2": b2,                       # raw (tail path)
        "w1_bd": _block_diag(w1, PACK).astype(compute_dtype),          # (128, 256)
        "b1_bd": jnp.tile(b1, PACK).reshape(1, P_HID).astype(jnp.float32),
        "w2_bd": _block_diag(w2, PACK).astype(compute_dtype),          # (256, 512)
        "b2_bd": jnp.tile(b2, PACK).reshape(1, P_OUT).astype(jnp.float32),
    }


def _choose_tile(rows, tile_p):
    """Clamp the row tile: keep >= ~4 grid steps (v7x megacore + pipelining),
    keep it a multiple of 8 (sublanes), and never below 8."""
    quarter = -(-rows // 4)              # cdiv(rows, 4)
    quarter = -(-quarter // 8) * 8       # round up to multiple of 8
    return max(8, min(tile_p, quarter))


def _vmem_limit_bytes(tile_p, compute_itemsize, out_itemsize):
    """Scoped-VMEM budget for the chosen tile (double-buffered in/out tiles,
    resident weights, and the in-kernel f32 intermediates)."""
    f32 = 4
    in_b = 2 * tile_p * P_IN * f32                                   # double-buffered input
    out_b = 2 * tile_p * P_OUT * out_itemsize                        # double-buffered output
    w_b = 2 * ((P_IN * P_HID + P_HID * P_OUT) * compute_itemsize
               + (P_HID + P_OUT) * f32)                              # weights + biases
    tmp_b = tile_p * (P_HID + P_OUT) * f32                           # h, y intermediates
    est = in_b + out_b + w_b + tmp_b + (8 << 20)                     # headroom
    # >= 32 MiB (beats v5e's 16 MiB default, equals v6e/v7x default),
    # <= 48 MiB (safe on v7x's 64 MiB physical VMEM).
    return int(min(max(est, 32 << 20), 48 << 20))


def feature_expansion_mlp(x, params, *, tile_p=TILE_P, out_dtype=jnp.float32):
    """x: (N, 8) float32 -> (N, 32) out_dtype.  Fused 2-layer MLP in one Pallas kernel.

    `params` is the dict returned by `expand_params` (computed once).
    The main N//16*16 rows go through the lane-dense Pallas kernel; the <=15
    leftover rows (if any) are handled in plain XLA — no full-array pad/copy.
    """
    n = x.shape[0]
    n_main = (n // PACK) * PACK
    rows = n_main // PACK
    pieces = []

    if rows > 0:
        x_packed = x[:n_main].reshape(rows, P_IN)     # free row-major reshape if N%16==0
        tp = _choose_tile(rows, tile_p)
        grid = (pl.cdiv(rows, tp),)                   # ragged last block masked by Pallas
        vmem_limit = _vmem_limit_bytes(
            tp,
            jnp.dtype(params["w1_bd"].dtype).itemsize,
            jnp.dtype(out_dtype).itemsize,
        )

        out_packed = pl.pallas_call(
            _mlp_kernel,
            out_shape=jax.ShapeDtypeStruct((rows, P_OUT), out_dtype),
            grid_spec=pltpu.PrefetchScalarGridSpec(
                num_scalar_prefetch=0,
                grid=grid,
                in_specs=[
                    pl.BlockSpec((tp, P_IN), lambda i: (i, 0)),
                    # Constant index maps -> weights fetched once, resident in VMEM.
                    pl.BlockSpec((P_IN, P_HID), lambda i: (0, 0)),
                    pl.BlockSpec((1, P_HID), lambda i: (0, 0)),
                    pl.BlockSpec((P_HID, P_OUT), lambda i: (0, 0)),
                    pl.BlockSpec((1, P_OUT), lambda i: (0, 0)),
                ],
                out_specs=pl.BlockSpec((tp, P_OUT), lambda i: (i, 0)),
            ),
            compiler_params=pltpu.CompilerParams(
                dimension_semantics=("parallel",),
                vmem_limit_bytes=vmem_limit,
            ),
        )(x_packed, params["w1_bd"], params["b1_bd"], params["w2_bd"], params["b2_bd"])
        pieces.append(out_packed.reshape(n_main, OUT_DIM))   # free row-major reshape

    if n_main < n:
        # <= 15 leftover rows: negligible compute; plain XLA instead of a
        # full-array pad/copy just to make the lane-packing reshape legal.
        x_tail = x[n_main:]
        h = jnp.maximum(x_tail @ params["w1"] + params["b1"], 0.0)
        y = jnp.maximum(h @ params["w2"] + params["b2"], 0.0)
        pieces.append(y.astype(out_dtype))

    return pieces[0] if len(pieces) == 1 else jnp.concatenate(pieces, axis=0)


def init_params(key):
    """Init mirroring nn.Linear(8,16) and nn.Linear(16,32).

    PyTorch stores Linear weight as (out, in); we store the transpose (in, out)
    so the kernel can do x @ W directly.
    """
    k1, k2, k3, k4 = jax.random.split(key, 4)
    bound1 = 1.0 / jnp.sqrt(IN_DIM)
    bound2 = 1.0 / jnp.sqrt(HID_DIM)
    w1 = jax.random.uniform(k1, (IN_DIM, HID_DIM), jnp.float32, -bound1, bound1)
    b1 = jax.random.uniform(k2, (HID_DIM,), jnp.float32, -bound1, bound1)
    w2 = jax.random.uniform(k3, (HID_DIM, OUT_DIM), jnp.float32, -bound2, bound2)
    b2 = jax.random.uniform(k4, (OUT_DIM,), jnp.float32, -bound2, bound2)
    return w1, b1, w2, b2


def reference_mlp(x, w1, b1, w2, b2):
    h = jnp.maximum(x @ w1 + b1, 0.0)
    return jnp.maximum(h @ w2 + b2, 0.0)


if __name__ == "__main__":
    key = jax.random.PRNGKey(0)
    kx, kp = jax.random.split(key)
    w1, b1, w2, b2 = init_params(kp)

    # Expanded params computed ONCE (f32 exact path and bf16 fast path).
    params_f32 = expand_params(w1, b1, w2, b2, compute_dtype=jnp.float32)
    params_bf16 = expand_params(w1, b1, w2, b2, compute_dtype=jnp.bfloat16)

    run = jax.jit(feature_expansion_mlp, static_argnames=("tile_p", "out_dtype"))

    # Case 1: N % 16 == 0 (zero-copy packing), multi-step grid (300 packed rows).
    n1 = 4800
    x1 = jax.random.normal(kx, (n1, IN_DIM), jnp.float32)
    out1 = jax.block_until_ready(run(x1, params_f32))
    ref1 = reference_mlp(x1, w1, b1, w2, b2)
    assert out1.shape == (n1, OUT_DIM)
    assert out1.dtype == jnp.float32
    assert jnp.allclose(out1, ref1, atol=1e-5, rtol=1e-5)

    # Case 2: small N not a multiple of 16 (exercises the <=15-row plain-XLA tail path).
    n2 = 200
    x2 = jax.random.normal(jax.random.fold_in(kx, 1), (n2, IN_DIM), jnp.float32)
    out2 = jax.block_until_ready(run(x2, params_f32))
    ref2 = reference_mlp(x2, w1, b1, w2, b2)
    assert out2.shape == (n2, OUT_DIM)
    assert jnp.allclose(out2, ref2, atol=1e-5, rtol=1e-5)

    # Case 3: bf16 MXU inputs + bf16 output (fast path; relaxed numerics).
    out3 = jax.block_until_ready(run(x1, params_bf16, out_dtype=jnp.bfloat16))
    assert out3.shape == (n1, OUT_DIM)
    assert out3.dtype == jnp.bfloat16
    assert jnp.allclose(out3.astype(jnp.float32), ref1, atol=5e-2, rtol=5e-2)

    print("KERNEL_OK")
</pallas_src>

<mosaic_0001>
module attributes {stable_mosaic.version = 11 : i64} {
  func.func @_mlp_kernel(%arg0: i32, %arg1: memref<80x128xf32, #tpu.memory_space<vmem>>, %arg2: memref<128x256xf32, #tpu.memory_space<vmem>>, %arg3: memref<1x256xf32, #tpu.memory_space<vmem>>, %arg4: memref<256x512xf32, #tpu.memory_space<vmem>>, %arg5: memref<1x512xf32, #tpu.memory_space<vmem>>, %arg6: memref<80x512xf32, #tpu.memory_space<vmem>>) attributes {dimension_semantics = [#tpu.dimension_semantics<parallel>], iteration_bounds = array<i64: 4>, scalar_prefetch = 0 : i64, scratch_operands = 0 : i64, tpu.core_type = #tpu.core_type<tc>, window_params = [{transform_indices = @transform_0, window_bounds = array<i64: 80, 128>}, {pipeline_mode = #tpu.pipeline_mode<synchronous>, transform_indices = @transform_1, window_bounds = array<i64: 128, 256>}, {pipeline_mode = #tpu.pipeline_mode<synchronous>, transform_indices = @transform_2, window_bounds = array<i64: 1, 256>}, {pipeline_mode = #tpu.pipeline_mode<synchronous>, transform_indices = @transform_3, window_bounds = array<i64: 256, 512>}, {pipeline_mode = #tpu.pipeline_mode<synchronous>, transform_indices = @transform_4, window_bounds = array<i64: 1, 512>}, {transform_indices = @transform_5, window_bounds = array<i64: 80, 512>}]} {
    %c0 = arith.constant 0 : index
    %c0_0 = arith.constant 0 : index
    %0 = vector.load %arg1[%c0, %c0_0] : memref<80x128xf32, #tpu.memory_space<vmem>>, vector<80x128xf32>
    %c0_1 = arith.constant 0 : index
    %c0_2 = arith.constant 0 : index
    %1 = vector.load %arg2[%c0_1, %c0_2] : memref<128x256xf32, #tpu.memory_space<vmem>>, vector<128x256xf32>
    %cst = arith.constant dense<0.000000e+00> : vector<80x256xf32>
    %2 = tpu.matmul %0, %1, %cst {dimension_numbers = #tpu.dot_dimension_numbers<[1], [0], [0], [1], [0, 0, 1, 1], [], []>} : vector<80x128xf32>, vector<128x256xf32>, vector<80x256xf32> -> vector<80x256xf32>
    %c0_3 = arith.constant 0 : index
    %c0_4 = arith.constant 0 : index
    %3 = vector.load %arg3[%c0_3, %c0_4] : memref<1x256xf32, #tpu.memory_space<vmem>>, vector<1x256xf32>
    %4 = vector.broadcast %3 : vector<1x256xf32> to vector<80x256xf32>
    %5 = arith.addf %2, %4 : vector<80x256xf32>
    %cst_5 = arith.constant 0.000000e+00 : f32
    %6 = vector.broadcast %cst_5 : f32 to vector<80x256xf32>
    %7 = arith.maximumf %5, %6 : vector<80x256xf32>
    %c0_6 = arith.constant 0 : index
    %c0_7 = arith.constant 0 : index
    %8 = vector.load %arg4[%c0_6, %c0_7] : memref<256x512xf32, #tpu.memory_space<vmem>>, vector<256x512xf32>
    %cst_8 = arith.constant dense<0.000000e+00> : vector<80x512xf32>
    %9 = tpu.matmul %7, %8, %cst_8 {dimension_numbers = #tpu.dot_dimension_numbers<[1], [0], [0], [1], [0, 0, 1, 1], [], []>} : vector<80x256xf32>, vector<256x512xf32>, vector<80x512xf32> -> vector<80x512xf32>
    %c0_9 = arith.constant 0 : index
    %c0_10 = arith.constant 0 : index
    %10 = vector.load %arg5[%c0_9, %c0_10] : memref<1x512xf32, #tpu.memory_space<vmem>>, vector<1x512xf32>
    %11 = vector.broadcast %10 : vector<1x512xf32> to vector<80x512xf32>
    %12 = arith.addf %9, %11 : vector<80x512xf32>
    %cst_11 = arith.constant 0.000000e+00 : f32
    %13 = vector.broadcast %cst_11 : f32 to vector<80x512xf32>
    %14 = arith.maximumf %12, %13 : vector<80x512xf32>
    %c0_12 = arith.constant 0 : index
    %c0_13 = arith.constant 0 : index
    %15 = vector.load %arg6[%c0_12, %c0_13] : memref<80x512xf32, #tpu.memory_space<vmem>>, vector<80x512xf32>
    tpu.vector_store %arg6[%c0_12, %c0_13], %14 {strides = array<i32>} : memref<80x512xf32, #tpu.memory_space<vmem>>, vector<80x512xf32>,
    return
  }
  func.func @transform_0(%arg0: i32) -> (i32, i32) {
    %c0_i32 = arith.constant 0 : i32
    %c0_i32_0 = arith.constant 0 : i32
    return %arg0, %c0_i32 : i32, i32
  }
  func.func @transform_1(%arg0: i32) -> (i32, i32) {
    %c0_i32 = arith.constant 0 : i32
    %c0_i32_0 = arith.constant 0 : i32
    %c0_i32_1 = arith.constant 0 : i32
    return %c0_i32, %c0_i32_0 : i32, i32
  }
  func.func @transform_2(%arg0: i32) -> (i32, i32) {
    %c0_i32 = arith.constant 0 : i32
    %c0_i32_0 = arith.constant 0 : i32
    %c0_i32_1 = arith.constant 0 : i32
    return %c0_i32, %c0_i32_0 : i32, i32
  }
  func.func @transform_3(%arg0: i32) -> (i32, i32) {
    %c0_i32 = arith.constant 0 : i32
    %c0_i32_0 = arith.constant 0 : i32
    %c0_i32_1 = arith.constant 0 : i32
    return %c0_i32, %c0_i32_0 : i32, i32
  }
  func.func @transform_4(%arg0: i32) -> (i32, i32) {
    %c0_i32 = arith.constant 0 : i32
    %c0_i32_0 = arith.constant 0 : i32
    %c0_i32_1 = arith.constant 0 : i32
    return %c0_i32, %c0_i32_0 : i32, i32
  }
  func.func @transform_5(%arg0: i32) -> (i32, i32) {
    %c0_i32 = arith.constant 0 : i32
    %c0_i32_0 = arith.constant 0 : i32
    return %arg0, %c0_i32 : i32, i32
  }
}

</mosaic_0001>

<llo_original>
// kernel: feature_expansion_mlp.1
$region0: #{feature_expansion_mlp.1}
  #allocation0 [shape = 'u32[]', space=smem, size = 0x4, offset = 0x4, fixed_abs, tag = 'smem constant byte address 0x4 - core index']
  #allocation1 [shape = 'u32[144,128]{1,0:T(1,128)}', space=vmem, size = 0x12000, scoped, tag = 'internal scratch']
  %s0 = inlined_call_operand.vmem [shape: f32[300,128], index: 0, kind: input, shape index: {}]
  %s1 = inlined_call_operand.vmem [shape: f32[128,256], index: 1, kind: input, shape index: {}]
  %s2 = inlined_call_operand.vmem [shape: f32[1,256], index: 2, kind: input, shape index: {}]
  %s3 = inlined_call_operand.vmem [shape: f32[256,512], index: 3, kind: input, shape index: {}]
  %s4 = inlined_call_operand.vmem [shape: f32[1,512], index: 4, kind: input, shape index: {}]
  %s5 = inlined_call_operand.vmem [shape: f32[300,512], index: 5, kind: output, shape index: {}]
  %s6 = sld [smem:[#allocation0]]
  $region79: #{feature_expansion_mlp.1} parent=0
    _
  %s8 = ssub.s32 1, %s6
  %s9 = scalar_select 0, %s8, %s6
  $region1: #{feature_expansion_mlp.1} parent=0
    #allocation2 [shape = 'u8[327680]{0}', space=vmem, size = 0x50000, scoped, tag = 'output window, operand 0']
    loop: start=0, step=1, limit=6
    $region2: #{feature_expansion_mlp.1} parent=1 // loop_pre_header
      _
    $region3: #{feature_expansion_mlp.1} parent=1 // loop_header
      %s11 = sphi 0, %s15
      %p12 = scmp.ge.s32.totalorder %s11, 6
      %s21 = sphi 0, %s23
      %s24 = sphi 0, %s21
      %s25 = sphi 0, %s24
      %s41 = sphi 0, %s25
      %s45 = sphi 0, %s45
      %s47 = sphi 0, %s45
      %s48 = sphi 0, %s47
      %s62 = sphi 0, %s48
      %s66 = sphi 0, %s66
      %s68 = sphi 0, %s66
      %s69 = sphi 0, %s68
      %s83 = sphi 0, %s69
      %s87 = sphi 0, %s87
      %s89 = sphi 0, %s87
      %s90 = sphi 0, %s89
      %s104 = sphi 0, %s90
      %s108 = sphi 0, %s108
      %s110 = sphi 0, %s108
      %s111 = sphi 0, %s110
      %s125 = sphi 0, %s111
      %s131 = sphi 0, %s133
      %s134 = sphi 0, %s131
      %s135 = sphi 0, %s134
      %s151 = sphi 0, %s135
    $region4: #{feature_expansion_mlp.1} parent=1 // loop_header_branch
      %14 = sbr.rel (%p12) target = $region8
    $region5: #{feature_expansion_mlp.1} parent=1 // loop_body
      %s16 = ssub.s32 %s11, 1
      %s17 = ssub.s32 %s11, 2
      %s18 = sadd.s32 %s11, 1
      %s19 = ssub.s32 %s11, %s18
      %p20 = scmp.eq.s32.totalorder %s19, 0
      %s22 = sadd.s32 %s21, 1
      %s23 = scalar_select %p20, %s21, %s22
      %p26 = pneg %p20
      %p27 = scmp.eq.s32.totalorder %s11, 3
      %p28 = por %p26, %p27
      %p29 = scmp.ne.s32.totalorder %s21, %s24
      %p30 = scmp.eq.s32.totalorder %s11, 0
      %p31 = por %p29, %p30
      %p32 = scmp.ne.s32.totalorder %s21, %s24
      %p33 = scmp.eq.s32.totalorder %s16, 3
      %p34 = por %p32, %p33
      %p35 = scmp.ne.s32.totalorder %s24, %s25
      %p36 = scmp.eq.s32.totalorder %s16, 0
      %p37 = por %p35, %p36
      %p38 = scmp.ne.s32.totalorder %s24, %s25
      %p39 = scmp.eq.s32.totalorder %s17, 3
      %p40 = por %p38, %p39
      %p42 = scmp.ne.s32.totalorder %s25, %s41
      %p43 = scmp.eq.s32.totalorder %s17, 0
      %p44 = por %p42, %p43
      %s46 = sadd.s32 %s45, 1
      %p49 = scmp.eq.s32.totalorder %s11, 3
      %p50 = scmp.ne.s32.totalorder %s45, %s47
      %p51 = scmp.eq.s32.totalorder %s11, 0
      %p52 = por %p50, %p51
      %p53 = scmp.ne.s32.totalorder %s45, %s47
      %p54 = scmp.eq.s32.totalorder %s16, 3
      %p55 = por %p53, %p54
      %p56 = scmp.ne.s32.totalorder %s47, %s48
      %p57 = scmp.eq.s32.totalorder %s16, 0
      %p58 = por %p56, %p57
      %p59 = scmp.ne.s32.totalorder %s47, %s48
      %p60 = scmp.eq.s32.totalorder %s17, 3
      %p61 = por %p59, %p60
      %p63 = scmp.ne.s32.totalorder %s48, %s62
      %p64 = scmp.eq.s32.totalorder %s17, 0
      %p65 = por %p63, %p64
      %s67 = sadd.s32 %s66, 1
      %p70 = scmp.eq.s32.totalorder %s11, 3
      %p71 = scmp.ne.s32.totalorder %s66, %s68
      %p72 = scmp.eq.s32.totalorder %s11, 0
      %p73 = por %p71, %p72
      %p74 = scmp.ne.s32.totalorder %s66, %s68
      %p75 = scmp.eq.s32.totalorder %s16, 3
      %p76 = por %p74, %p75
      %p77 = scmp.ne.s32.totalorder %s68, %s69
      %p78 = scmp.eq.s32.totalorder %s16, 0
      %p79 = por %p77, %p78
      %p80 = scmp.ne.s32.totalorder %s68, %s69
      %p81 = scmp.eq.s32.totalorder %s17, 3
      %p82 = por %p80, %p81
      %p84 = scmp.ne.s32.totalorder %s69, %s83
      %p85 = scmp.eq.s32.totalorder %s17, 0
      %p86 = por %p84, %p85
      %s88 = sadd.s32 %s87, 1
      %p91 = scmp.eq.s32.totalorder %s11, 3
      %p92 = scmp.ne.s32.totalorder %s87, %s89
      %p93 = scmp.eq.s32.totalorder %s11, 0
      %p94 = por %p92, %p93
      %p95 = scmp.ne.s32.totalorder %s87, %s89
      %p96 = scmp.eq.s32.totalorder %s16, 3
      %p97 = por %p95, %p96
      %p98 = scmp.ne.s32.totalorder %s89, %s90
      %p99 = scmp.eq.s32.totalorder %s16, 0
      %p100 = por %p98, %p99
      %p101 = scmp.ne.s32.totalorder %s89, %s90
      %p102 = scmp.eq.s32.totalorder %s17, 3
      %p103 = por %p101, %p102
      %p105 = scmp.ne.s32.totalorder %s90, %s104
      %p106 = scmp.eq.s32.totalorder %s17, 0
      %p107 = por %p105, %p106
      %s109 = sadd.s32 %s108, 1
      %p112 = scmp.eq.s32.totalorder %s11, 3
      %p113 = scmp.ne.s32.totalorder %s108, %s110
      %p114 = scmp.eq.s32.totalorder %s11, 0
      %p115 = por %p113, %p114
      %p116 = scmp.ne.s32.totalorder %s108, %s110
      %p117 = scmp.eq.s32.totalorder %s16, 3
      %p118 = por %p116, %p117
      %p119 = scmp.ne.s32.totalorder %s110, %s111
      %p120 = scmp.eq.s32.totalorder %s16, 0
      %p121 = por %p119, %p120
      %p122 = scmp.ne.s32.totalorder %s110, %s111
      %p123 = scmp.eq.s32.totalorder %s17, 3
      %p124 = por %p122, %p123
      %p126 = scmp.ne.s32.totalorder %s111, %s125
      %p127 = scmp.eq.s32.totalorder %s17, 0
      %p128 = por %p126, %p127
      %s129 = ssub.s32 %s11, %s18
      %p130 = scmp.eq.s32.totalorder %s129, 0
      %s132 = sadd.s32 %s131, 1
      %s133 = scalar_select %p130, %s131, %s132
      %p136 = pneg %p130
      %p137 = scmp.eq.s32.totalorder %s11, 3
      %p138 = por %p136, %p137
      %p139 = scmp.ne.s32.totalorder %s131, %s134
      %p140 = scmp.eq.s32.totalorder %s11, 0
      %p141 = por %p139, %p140
      %p142 = scmp.ne.s32.totalorder %s131, %s134
      %p143 = scmp.eq.s32.totalorder %s16, 3
      %p144 = por %p142, %p143
      %p145 = scmp.ne.s32.totalorder %s134, %s135
      %p146 = scmp.eq.s32.totalorder %s16, 0
      %p147 = por %p145, %p146
      %p148 = scmp.ne.s32.totalorder %s134, %s135
      %p149 = scmp.eq.s32.totalorder %s17, 3
      %p150 = por %p148, %p149
      %p152 = scmp.ne.s32.totalorder %s135, %s151
      %p153 = scmp.eq.s32.totalorder %s17, 0
      %p154 = por %p152, %p153
      %p155 = scmp.le.s32.totalorder 1, %s11
      %p156 = scmp.lt.s32.totalorder %s11, 5
      %p157 = pnand %p155, %p156
      %p158 = pneg %p157
      // Predicated region
      $region9: #{feature_expansion_mlp.1} parent=5 // pred_check
        _
      $region10: #{feature_expansion_mlp.1} parent=5 // pred_check_branch
        %160 = sbr.rel (%p157) target = $region12
      $region11: #{feature_expansion_mlp.1} parent=5 // pred_region
        %s161 = ssub.s32 %s11, 1
        // Predicated region
        $region13: #{feature_expansion_mlp.1} parent=11 // pred_check
          %p162 = pneg %p58
        $region14: #{feature_expansion_mlp.1} parent=11 // pred_check_branch
          %164 = sbr.rel (%p162) target = $region16
        $region15: #{feature_expansion_mlp.1} parent=11 // pred_region
          _
        $region16: #{feature_expansion_mlp.1} parent=11 // pred_fallthru
          _
        // Predicated region
        $region17: #{feature_expansion_mlp.1} parent=11 // pred_check
          %p165 = pneg %p79
        $region18: #{feature_expansion_mlp.1} parent=11 // pred_check_branch
          %167 = sbr.rel (%p165) target = $region20
        $region19: #{feature_expansion_mlp.1} parent=11 // pred_region
          _
        $region20: #{feature_expansion_mlp.1} parent=11 // pred_fallthru
          _
        // Predicated region
        $region21: #{feature_expansion_mlp.1} parent=11 // pred_check
          %p168 = pneg %p100
        $region22: #{feature_expansion_mlp.1} parent=11 // pred_check_branch
          %170 = sbr.rel (%p168) target = $region24
        $region23: #{feature_expansion_mlp.1} parent=11 // pred_region
          _
        $region24: #{feature_expansion_mlp.1} parent=11 // pred_fallthru
          _
        // Predicated region
        $region25: #{feature_expansion_mlp.1} parent=11 // pred_check
          %p171 = pneg %p121
        $region26: #{feature_expansion_mlp.1} parent=11 // pred_check_branch
          %173 = sbr.rel (%p171) target = $region28
        $region27: #{feature_expansion_mlp.1} parent=11 // pred_region
          _
        $region28: #{feature_expansion_mlp.1} parent=11 // pred_fallthru
          _
      $region12: #{feature_expansion_mlp.1} parent=5 // pred_fallthru
        _
      %p174 = scmp.lt.s32.totalorder %s11, 4
      // Predicated region
      $region29: #{feature_expansion_mlp.1} parent=5 // pred_check
        %p175 = pneg %p174
      $region30: #{feature_expansion_mlp.1} parent=5 // pred_check_branch
        %177 = sbr.rel (%p175) target = $region32
      $region31: #{feature_expansion_mlp.1} parent=5 // pred_region
        // Predicated region
        $region33: #{feature_expansion_mlp.1} parent=31 // pred_check
          %p178 = pneg %p31
        $region34: #{feature_expansion_mlp.1} parent=31 // pred_check_branch
          %180 = sbr.rel (%p178) target = $region36
        $region35: #{feature_expansion_mlp.1} parent=31 // pred_region
          %s181 = smul.u32 10, %s11
          %s182 = ssub.s32 38, %s181
          %p183 = scmp.lt.s32.totalorder %s182, 10
          %s184 = scalar_select %p183, %s182, 10
          %s185 = smul.u32 128, %s184
          %p186 = scmp.lt.s32.totalorder %s181, 37
          %s187 = scalar_select %p186, %s181, 37
          %s188 = smul.addr %s187, 8
          %s189 = scalar_lea.vmem %s0, %s188
          %s190 = smul.u32 10, %s11
          %s191 = ssub.s32 38, %s190
          %p192 = scmp.lt.s32.totalorder %s191, 10
          %s193 = scalar_select %p192, %s191, 10
          %s194 = smul.u32 128, %s193
        $region36: #{feature_expansion_mlp.1} parent=31 // pred_fallthru
          _
      $region32: #{feature_expansion_mlp.1} parent=5 // pred_fallthru
        _
      %p195 = scmp.le.s32.totalorder 1, %s11
      %p196 = scmp.lt.s32.totalorder %s11, 5
      %p197 = pnand %p195, %p196
      %p198 = pneg %p197
      // Predicated region
      $region37: #{feature_expansion_mlp.1} parent=5 // pred_check
        _
      $region38: #{feature_expansion_mlp.1} parent=5 // pred_check_branch
        %200 = sbr.rel (%p197) target = $region40
      $region39: #{feature_expansion_mlp.1} parent=5 // pred_region
        %s201 = ssub.s32 %s11, 1
        %s202 = smul.u32 10, %s16
        %s203 = ssub.s32 38, %s202
        %p204 = scmp.lt.s32.totalorder %s203, 10
        %s205 = scalar_select %p204, %s203, 10
        %s206 = smul.u32 128, %s205
        %p207 = scmp.lt.s32.totalorder %s202, 37
        %s208 = scalar_select %p207, %s202, 37
        %s209 = smul.addr %s208, 8
        %s210 = scalar_lea.vmem %s0, %s209
        %p211 = pneg %p37
        %p212 = pneg %p34
        %p213 = pneg %p58
        %p214 = pneg %p55
        %p215 = pneg %p79
        %p216 = pneg %p76
        %p217 = pneg %p100
        %p218 = pneg %p97
        %p219 = pneg %p121
        %p220 = pneg %p118
        %p221 = pneg %p147
        %p222 = pneg %p144
        %s223 = sand.u32 %s134, 1
        %s224 = sand.u32 %s134, 1
        %s225 = smul.addr %s224, 320
        %s226 = scalar_lea.vmem [#allocation2], %s225
        %s227 = smul.u32 10, %s16
        %s228 = ssub.s32 38, %s227
        %p229 = scmp.lt.s32.totalorder %s228, 10
        %s230 = scalar_select %p229, %s228, 10
        %s231 = smul.u32 128, %s230
        %p232 = scmp.lt.s32.totalorder %s227, 37
        %s233 = scalar_select %p232, %s227, 37
        %s234 = smul.addr %s233, 8
        %s235 = scalar_lea.vmem %s0, %s234
        %s236 = smul.u32 10, %s16
        %s237 = ssub.s32 38, %s236
        %p238 = scmp.lt.s32.totalorder %s237, 10
        %s239 = scalar_select %p238, %s237, 10
        %s240 = smul.u32 128, %s239
        %s241 = smul.u32 10, %s16
        %s242 = ssub.s32 38, %s241
        %p243 = scmp.lt.s32.totalorder %s242, 10
        %s244 = scalar_select %p243, %s242, 10
        %s245 = smul.u32 128, %s244
        %s246 = smul.u32 %s245, 4
        %v247 = vld [vmem:[%s235] sm:$0xff]
        %v248 = vld [vmem:[%s235 + $0x8] sm:$0xff]
        %v249 = vld [vmem:[%s235 + $0x10] sm:$0xff]
        %v250 = vld [vmem:[%s235 + $0x18] sm:$0xff]
        %v251 = vld [vmem:[%s235 + $0x20] sm:$0xff]
        %v252 = vld [vmem:[%s235 + $0x28] sm:$0xff]
        %v253 = vld [vmem:[%s235 + $0x30] sm:$0xff]
        %v254 = vld [vmem:[%s235 + $0x38] sm:$0xff]
        %v255 = vld [vmem:[%s235 + $0x40] sm:$0xff]
        %v256 = vld [vmem:[%s235 + $0x48] sm:$0xff]
        %v257 = vld [vmem:[%s1] sm:$0xff]
        %v258 = vld [vmem:[%s1 + $0x8] sm:$0xff]
        %v259 = vld [vmem:[%s1 + $0x10] sm:$0xff]
        %v260 = vld [vmem:[%s1 + $0x18] sm:$0xff]
        %v261 = vld [vmem:[%s1 + $0x20] sm:$0xff]
        %v262 = vld [vmem:[%s1 + $0x28] sm:$0xff]
        %v263 = vld [vmem:[%s1 + $0x30] sm:$0xff]
        %v264 = vld [vmem:[%s1 + $0x38] sm:$0xff]
        %v265 = vld [vmem:[%s1 + $0x40] sm:$0xff]
        %v266 = vld [vmem:[%s1 + $0x48] sm:$0xff]
        %v267 = vld [vmem:[%s1 + $0x50] sm:$0xff]
        %v268 = vld [vmem:[%s1 + $0x58] sm:$0xff]
        %v269 = vld [vmem:[%s1 + $0x60] sm:$0xff]
        %v270 = vld [vmem:[%s1 + $0x68] sm:$0xff]
        %v271 = vld [vmem:[%s1 + $0x70] sm:$0xff]
        %v272 = vld [vmem:[%s1 + $0x78] sm:$0xff]
        %v273 = vld [vmem:[%s1 + $0x80] sm:$0xff]
        %v274 = vld [vmem:[%s1 + $0x88] sm:$0xff]
        %v275 = vld [vmem:[%s1 + $0x90] sm:$0xff]
        %v276 = vld [vmem:[%s1 + $0x98] sm:$0xff]
        %v277 = vld [vmem:[%s1 + $0xa0] sm:$0xff]
        %v278 = vld [vmem:[%s1 + $0xa8] sm:$0xff]
        %v279 = vld [vmem:[%s1 + $0xb0] sm:$0xff]
        %v280 = vld [vmem:[%s1 + $0xb8] sm:$0xff]
        %v281 = vld [vmem:[%s1 + $0xc0] sm:$0xff]
        %v282 = vld [vmem:[%s1 + $0xc8] sm:$0xff]
        %v283 = vld [vmem:[%s1 + $0xd0] sm:$0xff]
        %v284 = vld [vmem:[%s1 + $0xd8] sm:$0xff]
        %v285 = vld [vmem:[%s1 + $0xe0] sm:$0xff]
        %v286 = vld [vmem:[%s1 + $0xe8] sm:$0xff]
        %v287 = vld [vmem:[%s1 + $0xf0] sm:$0xff]
        %v288 = vld [vmem:[%s1 + $0xf8] sm:$0xff]
        %v289 = vld [vmem:[%s2] sm:$0x3]
        %v291 = vlaneseq
        %v292 = vshrl.u32 %v291, 7
        %v293 = vsub.s32 0, %v292
        %v294 = vrot.slane %v289, %v293
        %v295 = vlaneseq
        %v296 = vshrl.u32 %v295, 7
        %v297 = vsub.s32 1, %v296
        %v298 = vrot.slane %v289, %v297
        %301 = vmatprep.subr.mxu0 %v258
        %302 = vmatpush1.msra.mxu0 %v257
        %303 = vmatprep.subr.mxu0 %v260
        %304 = vmatpush1.msra.mxu0 %v259
        %305 = vmatprep.subr.mxu0 %v262
        %306 = vmatpush1.msra.mxu0 %v261
        %307 = vmatprep.subr.mxu0 %v264
        %308 = vmatpush1.msra.mxu0 %v263
        %309 = vmatprep.subr.mxu0 %v266
        %310 = vmatpush1.msra.mxu0 %v265
        %311 = vmatprep.subr.mxu0 %v268
        %312 = vmatpush1.msra.mxu0 %v267
        %313 = vmatprep.subr.mxu0 %v270
        %314 = vmatpush1.msra.mxu0 %v269
        %315 = vmatprep.subr.mxu0 %v272
        %316 = vmatpush1.msra.mxu0 %v271
        %317 = vmatprep.subr.mxu0 %v274
        %318 = vmatpush1.msra.mxu0 %v273
        %319 = vmatprep.subr.mxu0 %v276
        %320 = vmatpush1.msra.mxu0 %v275
        %321 = vmatprep.subr.mxu0 %v278
        %322 = vmatpush1.msra.mxu0 %v277
        %323 = vmatprep.subr.mxu0 %v280
        %324 = vmatpush1.msra.mxu0 %v279
        %325 = vmatprep.subr.mxu0 %v282
        %326 = vmatpush1.msra.mxu0 %v281
        %327 = vmatprep.subr.mxu0 %v284
        %328 = vmatpush1.msra.mxu0 %v283
        %329 = vmatprep.subr.mxu0 %v286
        %330 = vmatpush1.msra.mxu0 %v285
        %331 = vmatprep.subr.mxu0 %v288
        %332 = vmatpush1.msra.mxu0 %v287
        %333 = vmatprep.subr.mxu0 0.0
        %334 = vmatpush1.msra.mxu0 0.0
        %335 = vmatprep.subr.mxu0 0.0
        %336 = vmatpush1.msra.mxu0 0.0
        %337 = vmatprep.subr.mxu0 0.0
        %338 = vmatpush1.msra.mxu0 0.0
        %339 = vmatprep.subr.mxu0 0.0
        %340 = vmatpush1.msra.mxu0 0.0
        %341 = vmatprep.subr.mxu0 0.0
        %342 = vmatpush1.msra.mxu0 0.0
        %343 = vmatprep.subr.mxu0 0.0
        %344 = vmatpush1.msra.mxu0 0.0
        %345 = vmatprep.subr.mxu0 0.0
        %346 = vmatpush1.msra.mxu0 0.0
        %347 = vmatprep.subr.mxu0 0.0
        %348 = vmatpush1.msra.mxu0 0.0
        %349 = vmatprep.subr.mxu0 0.0
        %350 = vmatpush1.msra.mxu0 0.0
        %351 = vmatprep.subr.mxu0 0.0
        %352 = vmatpush1.msra.mxu0 0.0
        %353 = vmatprep.subr.mxu0 0.0
        %354 = vmatpush1.msra.mxu0 0.0
        %355 = vmatprep.subr.mxu0 0.0
        %356 = vmatpush1.msra.mxu0 0.0
        %357 = vmatprep.subr.mxu0 0.0
        %358 = vmatpush1.msra.mxu0 0.0
        %359 = vmatprep.subr.mxu0 0.0
        %360 = vmatpush1.msra.mxu0 0.0
        %361 = vmatprep.subr.mxu0 0.0
        %362 = vmatpush1.msra.mxu0 0.0
        %363 = vmatprep.subr.mxu0 0.0
        %364 = vmatpush1.msra.mxu0 0.0
        %365 = vmatprep.mubr.f32.mxu0 0.0
        %366 = vmatmul.mubr.f32.gmra.mrb[0].mxu0 %v247
        %v367 = vpop.f32.mrb[0].mxu0
        %v368 = vadd.f32 %v294, %v367
        %v369 = vpop.f32.mrb[0].mxu0
        %v370 = vadd.f32 %v298, %v369
        %371 = vmatprep.mubr.f32.mxu0 0.0
        %372 = vmatmul.mubr.f32.gmra.mrb[0].mxu0 %v248
        %v373 = vpop.f32.mrb[0].mxu0
        %v374 = vadd.f32 %v294, %v373
        %v375 = vpop.f32.mrb[0].mxu0
        %v376 = vadd.f32 %v298, %v375
        %377 = vmatprep.mubr.f32.mxu0 0.0
        %378 = vmatmul.mubr.f32.gmra.mrb[0].mxu0 %v249
        %v379 = vpop.f32.mrb[0].mxu0
        %v380 = vadd.f32 %v294, %v379
        %v381 = vpop.f32.mrb[0].mxu0
        %v382 = vadd.f32 %v298, %v381
        %383 = vmatprep.mubr.f32.mxu0 0.0
        %384 = vmatmul.mubr.f32.gmra.mrb[0].mxu0 %v250
        %v385 = vpop.f32.mrb[0].mxu0
        %v386 = vadd.f32 %v294, %v385
        %v387 = vpop.f32.mrb[0].mxu0
        %v388 = vadd.f32 %v298, %v387
        %389 = vmatprep.mubr.f32.mxu0 0.0
        %390 = vmatmul.mubr.f32.gmra.mrb[0].mxu0 %v251
        %v391 = vpop.f32.mrb[0].mxu0
        %v392 = vadd.f32 %v294, %v391
        %v393 = vpop.f32.mrb[0].mxu0
        %v394 = vadd.f32 %v298, %v393
        %395 = vmatprep.mubr.f32.mxu0 0.0
        %396 = vmatmul.mubr.f32.gmra.mrb[0].mxu0 %v252
        %v397 = vpop.f32.mrb[0].mxu0
        %v398 = vadd.f32 %v294, %v397
        %v399 = vpop.f32.mrb[0].mxu0
        %v400 = vadd.f32 %v298, %v399
        %401 = vmatprep.mubr.f32.mxu0 0.0
        %402 = vmatmul.mubr.f32.gmra.mrb[0].mxu0 %v253
        %v403 = vpop.f32.mrb[0].mxu0
        %v404 = vadd.f32 %v294, %v403
        %v405 = vpop.f32.mrb[0].mxu0
        %v406 = vadd.f32 %v298, %v405
        %407 = vmatprep.mubr.f32.mxu0 0.0
        %408 = vmatmul.mubr.f32.gmra.mrb[0].mxu0 %v254
        %v409 = vpop.f32.mrb[0].mxu0
        %v410 = vadd.f32 %v294, %v409
        %v411 = vpop.f32.mrb[0].mxu0
        %v412 = vadd.f32 %v298, %v411
        %413 = vmatprep.mubr.f32.mxu0 0.0
        %414 = vmatmul.mubr.f32.gmra.mrb[0].mxu0 %v255
        %v415 = vpop.f32.mrb[0].mxu0
        %v416 = vadd.f32 %v294, %v415
        %v417 = vpop.f32.mrb[0].mxu0
        %v418 = vadd.f32 %v298, %v417
        %419 = vmatprep.mubr.f32.mxu0 0.0
        %420 = vmatmul.mubr.f32.gmra.mrb[0].mxu0 %v256
        %v421 = vpop.f32.mrb[0].mxu0
        %v422 = vadd.f32 %v294, %v421
        %v423 = vpop.f32.mrb[0].mxu0
        %v424 = vadd.f32 %v298, %v423
        %425 = vdwg.mxu0
        %v426 = vmax.f32 %v368, 0.0
        %v427 = vmax.f32 %v370, 0.0
        %v428 = vmax.f32 %v374, 0.0
        %v429 = vmax.f32 %v376, 0.0
        %v430 = vmax.f32 %v380, 0.0
        %v431 = vmax.f32 %v382, 0.0
        %v432 = vmax.f32 %v386, 0.0
        %v433 = vmax.f32 %v388, 0.0
        %v434 = vmax.f32 %v392, 0.0
        %v435 = vmax.f32 %v394, 0.0
        %v436 = vmax.f32 %v398, 0.0
        %v437 = vmax.f32 %v400, 0.0
        %v438 = vmax.f32 %v404, 0.0
        %v439 = vmax.f32 %v406, 0.0
        %v440 = vmax.f32 %v410, 0.0
        %v441 = vmax.f32 %v412, 0.0
        %v442 = vmax.f32 %v416, 0.0
        %v443 = vmax.f32 %v418, 0.0
        %v444 = vmax.f32 %v422, 0.0
        %v445 = vmax.f32 %v424, 0.0
        %v446 = vld [vmem:[%s3] sm:$0xff]
        %v447 = vld [vmem:[%s3 + $0x8] sm:$0xff]
        %v448 = vld [vmem:[%s3 + $0x10] sm:$0xff]
        %v449 = vld [vmem:[%s3 + $0x18] sm:$0xff]
        %v450 = vld [vmem:[%s3 + $0x20] sm:$0xff]
        %v451 = vld [vmem:[%s3 + $0x28] sm:$0xff]
        %v452 = vld [vmem:[%s3 + $0x30] sm:$0xff]
        %v453 = vld [vmem:[%s3 + $0x38] sm:$0xff]
        %v454 = vld [vmem:[%s3 + $0x40] sm:$0xff]
        %v455 = vld [vmem:[%s3 + $0x48] sm:$0xff]
        %v456 = vld [vmem:[%s3 + $0x50] sm:$0xff]
        %v457 = vld [vmem:[%s3 + $0x58] sm:$0xff]
        %v458 = vld [vmem:[%s3 + $0x60] sm:$0xff]
        %v459 = vld [vmem:[%s3 + $0x68] sm:$0xff]
        %v460 = vld [vmem:[%s3 + $0x70] sm:$0xff]
        %v461 = vld [vmem:[%s3 + $0x78] sm:$0xff]
        %v462 = vld [vmem:[%s3 + $0x80] sm:$0xff]
        %v463 = vld [vmem:[%s3 + $0x88] sm:$0xff]
        %v464 = vld [vmem:[%s3 + $0x90] sm:$0xff]
        %v465 = vld [vmem:[%s3 + $0x98] sm:$0xff]
        %v466 = vld [vmem:[%s3 + $0xa0] sm:$0xff]
        %v467 = vld [vmem:[%s3 + $0xa8] sm:$0xff]
        %v468 = vld [vmem:[%s3 + $0xb0] sm:$0xff]
        %v469 = vld [vmem:[%s3 + $0xb8] sm:$0xff]
        %v470 = vld [vmem:[%s3 + $0xc0] sm:$0xff]
        %v471 = vld [vmem:[%s3 + $0xc8] sm:$0xff]
        %v472 = vld [vmem:[%s3 + $0xd0] sm:$0xff]
        %v473 = vld [vmem:[%s3 + $0xd8] sm:$0xff]
        %v474 = vld [vmem:[%s3 + $0xe0] sm:$0xff]
        %v475 = vld [vmem:[%s3 + $0xe8] sm:$0xff]
        %v476 = vld [vmem:[%s3 + $0xf0] sm:$0xff]
        %v477 = vld [vmem:[%s3 + $0xf8] sm:$0xff]
        %v478 = vld [vmem:[%s3 + $0x100] sm:$0xff]
        %v479 = vld [vmem:[%s3 + $0x108] sm:$0xff]
        %v480 = vld [vmem:[%s3 + $0x110] sm:$0xff]
        %v481 = vld [vmem:[%s3 + $0x118] sm:$0xff]
        %v482 = vld [vmem:[%s3 + $0x120] sm:$0xff]
        %v483 = vld [vmem:[%s3 + $0x128] sm:$0xff]
        %v484 = vld [vmem:[%s3 + $0x130] sm:$0xff]
        %v485 = vld [vmem:[%s3 + $0x138] sm:$0xff]
        %v486 = vld [vmem:[%s3 + $0x140] sm:$0xff]
        %v487 = vld [vmem:[%s3 + $0x148] sm:$0xff]
        %v488 = vld [vmem:[%s3 + $0x150] sm:$0xff]
        %v489 = vld [vmem:[%s3 + $0x158] sm:$0xff]
        %v490 = vld [vmem:[%s3 + $0x160] sm:$0xff]
        %v491 = vld [vmem:[%s3 + $0x168] sm:$0xff]
        %v492 = vld [vmem:[%s3 + $0x170] sm:$0xff]
        %v493 = vld [vmem:[%s3 + $0x178] sm:$0xff]
        %v494 = vld [vmem:[%s3 + $0x180] sm:$0xff]
        %v495 = vld [vmem:[%s3 + $0x188] sm:$0xff]
        %v496 = vld [vmem:[%s3 + $0x190] sm:$0xff]
        %v497 = vld [vmem:[%s3 + $0x198] sm:$0xff]
        %v498 = vld [vmem:[%s3 + $0x1a0] sm:$0xff]
        %v499 = vld [vmem:[%s3 + $0x1a8] sm:$0xff]
        %v500 = vld [vmem:[%s3 + $0x1b0] sm:$0xff]
        %v501 = vld [vmem:[%s3 + $0x1b8] sm:$0xff]
        %v502 = vld [vmem:[%s3 + $0x1c0] sm:$0xff]
        %v503 = vld [vmem:[%s3 + $0x1c8] sm:$0xff]
        %v504 = vld [vmem:[%s3 + $0x1d0] sm:$0xff]
        %v505 = vld [vmem:[%s3 + $0x1d8] sm:$0xff]
        %v506 = vld [vmem:[%s3 + $0x1e0] sm:$0xff]
        %v507 = vld [vmem:[%s3 + $0x1e8] sm:$0xff]
        %v508 = vld [vmem:[%s3 + $0x1f0] sm:$0xff]
        %v509 = vld [vmem:[%s3 + $0x1f8] sm:$0xff]
        %v510 = vld [vmem:[%s3 + $0x200] sm:$0xff]
        %v511 = vld [vmem:[%s3 + $0x208] sm:$0xff]
        %v512 = vld [vmem:[%s3 + $0x210] sm:$0xff]
        %v513 = vld [vmem:[%s3 + $0x218] sm:$0xff]
        %v514 = vld [vmem:[%s3 + $0x220] sm:$0xff]
        %v515 = vld [vmem:[%s3 + $0x228] sm:$0xff]
        %v516 = vld [vmem:[%s3 + $0x230] sm:$0xff]
        %v517 = vld [vmem:[%s3 + $0x238] sm:$0xff]
        %v518 = vld [vmem:[%s3 + $0x240] sm:$0xff]
        %v519 = vld [vmem:[%s3 + $0x248] sm:$0xff]
        %v520 = vld [vmem:[%s3 + $0x250] sm:$0xff]
        %v521 = vld [vmem:[%s3 + $0x258] sm:$0xff]
        %v522 = vld [vmem:[%s3 + $0x260] sm:$0xff]
        %v523 = vld [vmem:[%s3 + $0x268] sm:$0xff]
        %v524 = vld [vmem:[%s3 + $0x270] sm:$0xff]
        %v525 = vld [vmem:[%s3 + $0x278] sm:$0xff]
        %v526 = vld [vmem:[%s3 + $0x280] sm:$0xff]
        %v527 = vld [vmem:[%s3 + $0x288] sm:$0xff]
        %v528 = vld [vmem:[%s3 + $0x290] sm:$0xff]
        %v529 = vld [vmem:[%s3 + $0x298] sm:$0xff]
        %v530 = vld [vmem:[%s3 + $0x2a0] sm:$0xff]
        %v531 = vld [vmem:[%s3 + $0x2a8] sm:$0xff]
        %v532 = vld [vmem:[%s3 + $0x2b0] sm:$0xff]
        %v533 = vld [vmem:[%s3 + $0x2b8] sm:$0xff]
        %v534 = vld [vmem:[%s3 + $0x2c0] sm:$0xff]
        %v535 = vld [vmem:[%s3 + $0x2c8] sm:$0xff]
        %v536 = vld [vmem:[%s3 + $0x2d0] sm:$0xff]
        %v537 = vld [vmem:[%s3 + $0x2d8] sm:$0xff]
        %v538 = vld [vmem:[%s3 + $0x2e0] sm:$0xff]
        %v539 = vld [vmem:[%s3 + $0x2e8] sm:$0xff]
        %v540 = vld [vmem:[%s3 + $0x2f0] sm:$0xff]
        %v541 = vld [vmem:[%s3 + $0x2f8] sm:$0xff]
        %v542 = vld [vmem:[%s3 + $0x300] sm:$0xff]
        %v543 = vld [vmem:[%s3 + $0x308] sm:$0xff]
        %v544 = vld [vmem:[%s3 + $0x310] sm:$0xff]
        %v545 = vld [vmem:[%s3 + $0x318] sm:$0xff]
        %v546 = vld [vmem:[%s3 + $0x320] sm:$0xff]
        %v547 = vld [vmem:[%s3 + $0x328] sm:$0xff]
        %v548 = vld [vmem:[%s3 + $0x330] sm:$0xff]
        %v549 = vld [vmem:[%s3 + $0x338] sm:$0xff]
        %v550 = vld [vmem:[%s3 + $0x340] sm:$0xff]
        %v551 = vld [vmem:[%s3 + $0x348] sm:$0xff]
        %v552 = vld [vmem:[%s3 + $0x350] sm:$0xff]
        %v553 = vld [vmem:[%s3 + $0x358] sm:$0xff]
        %v554 = vld [vmem:[%s3 + $0x360] sm:$0xff]
        %v555 = vld [vmem:[%s3 + $0x368] sm:$0xff]
        %v556 = vld [vmem:[%s3 + $0x370] sm:$0xff]
        %v557 = vld [vmem:[%s3 + $0x378] sm:$0xff]
        %v558 = vld [vmem:[%s3 + $0x380] sm:$0xff]
        %v559 = vld [vmem:[%s3 + $0x388] sm:$0xff]
        %v560 = vld [vmem:[%s3 + $0x390] sm:$0xff]
        %v561 = vld [vmem:[%s3 + $0x398] sm:$0xff]
        %v562 = vld [vmem:[%s3 + $0x3a0] sm:$0xff]
        %v563 = vld [vmem:[%s3 + $0x3a8] sm:$0xff]
        %v564 = vld [vmem:[%s3 + $0x3b0] sm:$0xff]
        %v565 = vld [vmem:[%s3 + $0x3b8] sm:$0xff]
        %v566 = vld [vmem:[%s3 + $0x3c0] sm:$0xff]
        %v567 = vld [vmem:[%s3 + $0x3c8] sm:$0xff]
        %v568 = vld [vmem:[%s3 + $0x3d0] sm:$0xff]
        %v569 = vld [vmem:[%s3 + $0x3d8] sm:$0xff]
        %v570 = vld [vmem:[%s3 + $0x3e0] sm:$0xff]
        %v571 = vld [vmem:[%s3 + $0x3e8] sm:$0xff]
        %v572 = vld [vmem:[%s3 + $0x3f0] sm:$0xff]
        %v573 = vld [vmem:[%s3 + $0x3f8] sm:$0xff]
        %v574 = vld [vmem:[%s4] sm:$0xf]
        %v576 = vlaneseq
        %v577 = vshrl.u32 %v576, 7
        %v578 = vsub.s32 0, %v577
        %v579 = vrot.slane %v574, %v578
        %v580 = vlaneseq
        %v581 = vshrl.u32 %v580, 7
        %v582 = vsub.s32 1, %v581
        %v583 = vrot.slane %v574, %v582
        %v584 = vlaneseq
        %v585 = vshrl.u32 %v584, 7
        %v586 = vsub.s32 2, %v585
        %v587 = vrot.slane %v574, %v586
        %v588 = vlaneseq
        %v589 = vshrl.u32 %v588, 7
        %v590 = vsub.s32 3, %v589
        %v591 = vrot.slane %v574, %v590
        %596 = vmatprep.subr.mxu0 %v447
        %597 = vmatpush1.msra.mxu0 %v446
        %598 = vmatprep.subr.mxu0 %v451
        %599 = vmatpush1.msra.mxu0 %v450
        %600 = vmatprep.subr.mxu0 %v455
        %601 = vmatpush1.msra.mxu0 %v454
        %602 = vmatprep.subr.mxu0 %v459
        %603 = vmatpush1.msra.mxu0 %v458
        %604 = vmatprep.subr.mxu0 %v463
        %605 = vmatpush1.msra.mxu0 %v462
        %606 = vmatprep.subr.mxu0 %v467
        %607 = vmatpush1.msra.mxu0 %v466
        %608 = vmatprep.subr.mxu0 %v471
        %609 = vmatpush1.msra.mxu0 %v470
        %610 = vmatprep.subr.mxu0 %v475
        %611 = vmatpush1.msra.mxu0 %v474
        %612 = vmatprep.subr.mxu0 %v479
        %613 = vmatpush1.msra.mxu0 %v478
        %614 = vmatprep.subr.mxu0 %v483
        %615 = vmatpush1.msra.mxu0 %v482
        %616 = vmatprep.subr.mxu0 %v487
        %617 = vmatpush1.msra.mxu0 %v486
        %618 = vmatprep.subr.mxu0 %v491
        %619 = vmatpush1.msra.mxu0 %v490
        %620 = vmatprep.subr.mxu0 %v495
        %621 = vmatpush1.msra.mxu0 %v494
        %622 = vmatprep.subr.mxu0 %v499
        %623 = vmatpush1.msra.mxu0 %v498
        %624 = vmatprep.subr.mxu0 %v503
        %625 = vmatpush1.msra.mxu0 %v502
        %626 = vmatprep.subr.mxu0 %v507
        %627 = vmatpush1.msra.mxu0 %v506
        %628 = vmatprep.subr.mxu0 %v511
        %629 = vmatpush1.msra.mxu0 %v510
        %630 = vmatprep.subr.mxu0 %v515
        %631 = vmatpush1.msra.mxu0 %v514
        %632 = vmatprep.subr.mxu0 %v519
        %633 = vmatpush1.msra.mxu0 %v518
        %634 = vmatprep.subr.mxu0 %v523
        %635 = vmatpush1.msra.mxu0 %v522
        %636 = vmatprep.subr.mxu0 %v527
        %637 = vmatpush1.msra.mxu0 %v526
        %638 = vmatprep.subr.mxu0 %v531
        %639 = vmatpush1.msra.mxu0 %v530
        %640 = vmatprep.subr.mxu0 %v535
        %641 = vmatpush1.msra.mxu0 %v534
        %642 = vmatprep.subr.mxu0 %v539
        %643 = vmatpush1.msra.mxu0 %v538
        %644 = vmatprep.subr.mxu0 %v543
        %645 = vmatpush1.msra.mxu0 %v542
        %646 = vmatprep.subr.mxu0 %v547
        %647 = vmatpush1.msra.mxu0 %v546
        %648 = vmatprep.subr.mxu0 %v551
        %649 = vmatpush1.msra.mxu0 %v550
        %650 = vmatprep.subr.mxu0 %v555
        %651 = vmatpush1.msra.mxu0 %v554
        %652 = vmatprep.subr.mxu0 %v559
        %653 = vmatpush1.msra.mxu0 %v558
        %654 = vmatprep.subr.mxu0 %v563
        %655 = vmatpush1.msra.mxu0 %v562
        %656 = vmatprep.subr.mxu0 %v567
        %657 = vmatpush1.msra.mxu0 %v566
        %658 = vmatprep.subr.mxu0 %v571
        %659 = vmatpush1.msra.mxu0 %v570
        %660 = vmatprep.mubr.f32.mxu0 %v427
        %661 = vmatmul.mubr.f32.gmra.mrb[0].mxu0 %v426
        %v662 = vpop.f32.mrb[0].mxu0
        %v663 = vadd.f32 %v579, %v662
        %v664 = vpop.f32.mrb[0].mxu0
        %v665 = vadd.f32 %v583, %v664
        %666 = vmatprep.mubr.f32.mxu0 %v429
        %667 = vmatmul.mubr.f32.gmra.mrb[0].mxu0 %v428
        %v668 = vpop.f32.mrb[0].mxu0
        %v669 = vadd.f32 %v579, %v668
        %v670 = vpop.f32.mrb[0].mxu0
        %v671 = vadd.f32 %v583, %v670
        %672 = vmatprep.mubr.f32.mxu0 %v431
        %673 = vmatmul.mubr.f32.gmra.mrb[0].mxu0 %v430
        %v674 = vpop.f32.mrb[0].mxu0
        %v675 = vadd.f32 %v579, %v674
        %v676 = vpop.f32.mrb[0].mxu0
        %v677 = vadd.f32 %v583, %v676
        %678 = vmatprep.mubr.f32.mxu0 %v433
        %679 = vmatmul.mubr.f32.gmra.mrb[0].mxu0 %v432
        %v680 = vpop.f32.mrb[0].mxu0
        %v681 = vadd.f32 %v579, %v680
        %v682 = vpop.f32.mrb[0].mxu0
        %v683 = vadd.f32 %v583, %v682
        %684 = vmatprep.mubr.f32.mxu0 %v435
        %685 = vmatmul.mubr.f32.gmra.mrb[0].mxu0 %v434
        %v686 = vpop.f32.mrb[0].mxu0
        %v687 = vadd.f32 %v579, %v686
        %v688 = vpop.f32.mrb[0].mxu0
        %v689 = vadd.f32 %v583, %v688
        %690 = vmatprep.mubr.f32.mxu0 %v437
        %691 = vmatmul.mubr.f32.gmra.mrb[0].mxu0 %v436
        %v692 = vpop.f32.mrb[0].mxu0
        %v693 = vadd.f32 %v579, %v692
        %v694 = vpop.f32.mrb[0].mxu0
        %v695 = vadd.f32 %v583, %v694
        %696 = vmatprep.mubr.f32.mxu0 %v439
        %697 = vmatmul.mubr.f32.gmra.mrb[0].mxu0 %v438
        %v698 = vpop.f32.mrb[0].mxu0
        %v699 = vadd.f32 %v579, %v698
        %v700 = vpop.f32.mrb[0].mxu0
        %v701 = vadd.f32 %v583, %v700
        %702 = vmatprep.mubr.f32.mxu0 %v441
        %703 = vmatmul.mubr.f32.gmra.mrb[0].mxu0 %v440
        %v704 = vpop.f32.mrb[0].mxu0
        %v705 = vadd.f32 %v579, %v704
        %v706 = vpop.f32.mrb[0].mxu0
        %v707 = vadd.f32 %v583, %v706
        %708 = vmatprep.mubr.f32.mxu0 %v443
        %709 = vmatmul.mubr.f32.gmra.mrb[0].mxu0 %v442
        %v710 = vpop.f32.mrb[0].mxu0
        %v711 = vadd.f32 %v579, %v710
        %v712 = vpop.f32.mrb[0].mxu0
        %v713 = vadd.f32 %v583, %v712
        %714 = vmatprep.mubr.f32.mxu0 %v445
        %715 = vmatmul.mubr.f32.gmra.mrb[0].mxu0 %v444
        %v716 = vpop.f32.mrb[0].mxu0
        %v717 = vadd.f32 %v579, %v716
        %v718 = vpop.f32.mrb[0].mxu0
        %v719 = vadd.f32 %v583, %v718
        %720 = vdwg.mxu0
        %721 = vmatprep.subr.mxu0 %v449
        %722 = vmatpush1.msra.mxu0 %v448
        %723 = vmatprep.subr.mxu0 %v453
        %724 = vmatpush1.msra.mxu0 %v452
        %725 = vmatprep.subr.mxu0 %v457
        %726 = vmatpush1.msra.mxu0 %v456
        %727 = vmatprep.subr.mxu0 %v461
        %728 = vmatpush1.msra.mxu0 %v460
        %729 = vmatprep.subr.mxu0 %v465
        %730 = vmatpush1.msra.mxu0 %v464
        %731 = vmatprep.subr.mxu0 %v469
        %732 = vmatpush1.msra.mxu0 %v468
        %733 = vmatprep.subr.mxu0 %v473
        %734 = vmatpush1.msra.mxu0 %v472
        %735 = vmatprep.subr.mxu0 %v477
        %736 = vmatpush1.msra.mxu0 %v476
        %737 = vmatprep.subr.mxu0 %v481
        %738 = vmatpush1.msra.mxu0 %v480
        %739 = vmatprep.subr.mxu0 %v485
        %740 = vmatpush1.msra.mxu0 %v484
        %741 = vmatprep.subr.mxu0 %v489
        %742 = vmatpush1.msra.mxu0 %v488
        %743 = vmatprep.subr.mxu0 %v493
        %744 = vmatpush1.msra.mxu0 %v492
        %745 = vmatprep.subr.mxu0 %v497
        %746 = vmatpush1.msra.mxu0 %v496
        %747 = vmatprep.subr.mxu0 %v501
        %748 = vmatpush1.msra.mxu0 %v500
        %749 = vmatprep.subr.mxu0 %v505
        %750 = vmatpush1.msra.mxu0 %v504
        %751 = vmatprep.subr.mxu0 %v509
        %752 = vmatpush1.msra.mxu0 %v508
        %753 = vmatprep.subr.mxu0 %v513
        %754 = vmatpush1.msra.mxu0 %v512
        %755 = vmatprep.subr.mxu0 %v517
        %756 = vmatpush1.msra.mxu0 %v516
        %757 = vmatprep.subr.mxu0 %v521
        %758 = vmatpush1.msra.mxu0 %v520
        %759 = vmatprep.subr.mxu0 %v525
        %760 = vmatpush1.msra.mxu0 %v524
        %761 = vmatprep.subr.mxu0 %v529
        %762 = vmatpush1.msra.mxu0 %v528
        %763 = vmatprep.subr.mxu0 %v533
        %764 = vmatpush1.msra.mxu0 %v532
        %765 = vmatprep.subr.mxu0 %v537
        %766 = vmatpush1.msra.mxu0 %v536
        %767 = vmatprep.subr.mxu0 %v541
        %768 = vmatpush1.msra.mxu0 %v540
        %769 = vmatprep.subr.mxu0 %v545
        %770 = vmatpush1.msra.mxu0 %v544
        %771 = vmatprep.subr.mxu0 %v549
        %772 = vmatpush1.msra.mxu0 %v548
        %773 = vmatprep.subr.mxu0 %v553
        %774 = vmatpush1.msra.mxu0 %v552
        %775 = vmatprep.subr.mxu0 %v557
        %776 = vmatpush1.msra.mxu0 %v556
        %777 = vmatprep.subr.mxu0 %v561
        %778 = vmatpush1.msra.mxu0 %v560
        %779 = vmatprep.subr.mxu0 %v565
        %780 = vmatpush1.msra.mxu0 %v564
        %781 = vmatprep.subr.mxu0 %v569
        %782 = vmatpush1.msra.mxu0 %v568
        %783 = vmatprep.subr.mxu0 %v573
        %784 = vmatpush1.msra.mxu0 %v572
        %785 = vmatprep.mubr.f32.mxu0 %v427
        %786 = vmatmul.mubr.f32.gmra.mrb[0].mxu0 %v426
        %v787 = vpop.f32.mrb[0].mxu0
        %v788 = vadd.f32 %v587, %v787
        %v789 = vpop.f32.mrb[0].mxu0
        %v790 = vadd.f32 %v591, %v789
        %791 = vmatprep.mubr.f32.mxu0 %v429
        %792 = vmatmul.mubr.f32.gmra.mrb[0].mxu0 %v428
        %v793 = vpop.f32.mrb[0].mxu0
        %v794 = vadd.f32 %v587, %v793
        %v795 = vpop.f32.mrb[0].mxu0
        %v796 = vadd.f32 %v591, %v795
        %797 = vmatprep.mubr.f32.mxu0 %v431
        %798 = vmatmul.mubr.f32.gmra.mrb[0].mxu0 %v430
        %v799 = vpop.f32.mrb[0].mxu0
        %v800 = vadd.f32 %v587, %v799
        %v801 = vpop.f32.mrb[0].mxu0
        %v802 = vadd.f32 %v591, %v801
        %803 = vmatprep.mubr.f32.mxu0 %v433
        %804 = vmatmul.mubr.f32.gmra.mrb[0].mxu0 %v432
        %v805 = vpop.f32.mrb[0].mxu0
        %v806 = vadd.f32 %v587, %v805
        %v807 = vpop.f32.mrb[0].mxu0
        %v808 = vadd.f32 %v591, %v807
        %809 = vmatprep.mubr.f32.mxu0 %v435
        %810 = vmatmul.mubr.f32.gmra.mrb[0].mxu0 %v434
        %v811 = vpop.f32.mrb[0].mxu0
        %v812 = vadd.f32 %v587, %v811
        %v813 = vpop.f32.mrb[0].mxu0
        %v814 = vadd.f32 %v591, %v813
        %815 = vmatprep.mubr.f32.mxu0 %v437
        %816 = vmatmul.mubr.f32.gmra.mrb[0].mxu0 %v436
        %v817 = vpop.f32.mrb[0].mxu0
        %v818 = vadd.f32 %v587, %v817
        %v819 = vpop.f32.mrb[0].mxu0
        %v820 = vadd.f32 %v591, %v819
        %821 = vmatprep.mubr.f32.mxu0 %v439
        %822 = vmatmul.mubr.f32.gmra.mrb[0].mxu0 %v438
        %v823 = vpop.f32.mrb[0].mxu0
        %v824 = vadd.f32 %v587, %v823
        %v825 = vpop.f32.mrb[0].mxu0
        %v826 = vadd.f32 %v591, %v825
        %827 = vmatprep.mubr.f32.mxu0 %v441
        %828 = vmatmul.mubr.f32.gmra.mrb[0].mxu0 %v440
        %v829 = vpop.f32.mrb[0].mxu0
        %v830 = vadd.f32 %v587, %v829
        %v831 = vpop.f32.mrb[0].mxu0
        %v832 = vadd.f32 %v591, %v831
        %833 = vmatprep.mubr.f32.mxu0 %v443
        %834 = vmatmul.mubr.f32.gmra.mrb[0].mxu0 %v442
        %v835 = vpop.f32.mrb[0].mxu0
        %v836 = vadd.f32 %v587, %v835
        %v837 = vpop.f32.mrb[0].mxu0
        %v838 = vadd.f32 %v591, %v837
        %839 = vmatprep.mubr.f32.mxu0 %v445
        %840 = vmatmul.mubr.f32.gmra.mrb[0].mxu0 %v444
        %v841 = vpop.f32.mrb[0].mxu0
        %v842 = vadd.f32 %v587, %v841
        %v843 = vpop.f32.mrb[0].mxu0
        %v844 = vadd.f32 %v591, %v843
        %845 = vdwg.mxu0
        %v846 = vmax.f32 %v663, 0.0
        %v847 = vmax.f32 %v665, 0.0
        %v848 = vmax.f32 %v788, 0.0
        %v849 = vmax.f32 %v790, 0.0
        %v850 = vmax.f32 %v669, 0.0
        %v851 = vmax.f32 %v671, 0.0
        %v852 = vmax.f32 %v794, 0.0
        %v853 = vmax.f32 %v796, 0.0
        %v854 = vmax.f32 %v675, 0.0
        %v855 = vmax.f32 %v677, 0.0
        %v856 = vmax.f32 %v800, 0.0
        %v857 = vmax.f32 %v802, 0.0
        %v858 = vmax.f32 %v681, 0.0
        %v859 = vmax.f32 %v683, 0.0
        %v860 = vmax.f32 %v806, 0.0
        %v861 = vmax.f32 %v808, 0.0
        %v862 = vmax.f32 %v687, 0.0
        %v863 = vmax.f32 %v689, 0.0
        %v864 = vmax.f32 %v812, 0.0
        %v865 = vmax.f32 %v814, 0.0
        %v866 = vmax.f32 %v693, 0.0
        %v867 = vmax.f32 %v695, 0.0
        %v868 = vmax.f32 %v818, 0.0
        %v869 = vmax.f32 %v820, 0.0
        %v870 = vmax.f32 %v699, 0.0
        %v871 = vmax.f32 %v701, 0.0
        %v872 = vmax.f32 %v824, 0.0
        %v873 = vmax.f32 %v826, 0.0
        %v874 = vmax.f32 %v705, 0.0
        %v875 = vmax.f32 %v707, 0.0
        %v876 = vmax.f32 %v830, 0.0
        %v877 = vmax.f32 %v832, 0.0
        %v878 = vmax.f32 %v711, 0.0
        %v879 = vmax.f32 %v713, 0.0
        %v880 = vmax.f32 %v836, 0.0
        %v881 = vmax.f32 %v838, 0.0
        %v882 = vmax.f32 %v717, 0.0
        %v883 = vmax.f32 %v719, 0.0
        %v884 = vmax.f32 %v842, 0.0
        %v885 = vmax.f32 %v844, 0.0
        %886 = vst [vmem:[%s226] sm:$0xff] %v846
        %887 = vst [vmem:[%s226 + $0x8] sm:$0xff] %v847
        %888 = vst [vmem:[%s226 + $0x10] sm:$0xff] %v848
        %889 = vst [vmem:[%s226 + $0x18] sm:$0xff] %v849
        %890 = vst [vmem:[%s226 + $0x20] sm:$0xff] %v850
        %891 = vst [vmem:[%s226 + $0x28] sm:$0xff] %v851
        %892 = vst [vmem:[%s226 + $0x30] sm:$0xff] %v852
        %893 = vst [vmem:[%s226 + $0x38] sm:$0xff] %v853
        %894 = vst [vmem:[%s226 + $0x40] sm:$0xff] %v854
        %895 = vst [vmem:[%s226 + $0x48] sm:$0xff] %v855
        %896 = vst [vmem:[%s226 + $0x50] sm:$0xff] %v856
        %897 = vst [vmem:[%s226 + $0x58] sm:$0xff] %v857
        %898 = vst [vmem:[%s226 + $0x60] sm:$0xff] %v858
        %899 = vst [vmem:[%s226 + $0x68] sm:$0xff] %v859
        %900 = vst [vmem:[%s226 + $0x70] sm:$0xff] %v860
        %901 = vst [vmem:[%s226 + $0x78] sm:$0xff] %v861
        %902 = vst [vmem:[%s226 + $0x80] sm:$0xff] %v862
        %903 = vst [vmem:[%s226 + $0x88] sm:$0xff] %v863
        %904 = vst [vmem:[%s226 + $0x90] sm:$0xff] %v864
        %905 = vst [vmem:[%s226 + $0x98] sm:$0xff] %v865
        %906 = vst [vmem:[%s226 + $0xa0] sm:$0xff] %v866
        %907 = vst [vmem:[%s226 + $0xa8] sm:$0xff] %v867
        %908 = vst [vmem:[%s226 + $0xb0] sm:$0xff] %v868
        %909 = vst [vmem:[%s226 + $0xb8] sm:$0xff] %v869
        %910 = vst [vmem:[%s226 + $0xc0] sm:$0xff] %v870
        %911 = vst [vmem:[%s226 + $0xc8] sm:$0xff] %v871
        %912 = vst [vmem:[%s226 + $0xd0] sm:$0xff] %v872
        %913 = vst [vmem:[%s226 + $0xd8] sm:$0xff] %v873
        %914 = vst [vmem:[%s226 + $0xe0] sm:$0xff] %v874
        %915 = vst [vmem:[%s226 + $0xe8] sm:$0xff] %v875
        %916 = vst [vmem:[%s226 + $0xf0] sm:$0xff] %v876
        %917 = vst [vmem:[%s226 + $0xf8] sm:$0xff] %v877
        %918 = vst [vmem:[%s226 + $0x100] sm:$0xff] %v878
        %919 = vst [vmem:[%s226 + $0x108] sm:$0xff] %v879
        %920 = vst [vmem:[%s226 + $0x110] sm:$0xff] %v880
        %921 = vst [vmem:[%s226 + $0x118] sm:$0xff] %v881
        %922 = vst [vmem:[%s226 + $0x120] sm:$0xff] %v882
        %923 = vst [vmem:[%s226 + $0x128] sm:$0xff] %v883
        %924 = vst [vmem:[%s226 + $0x130] sm:$0xff] %v884
        %925 = vst [vmem:[%s226 + $0x138] sm:$0xff] %v885
        %s926 = sand.u32 %s134, 1
        %s927 = sand.u32 %s134, 1
        %s928 = smul.addr %s927, 320
        %s929 = scalar_lea.vmem [#allocation2], %s928
        // Predicated region
        $region41: #{feature_expansion_mlp.1} parent=39 // pred_check
          %p930 = pneg %p144
        $region42: #{feature_expansion_mlp.1} parent=39 // pred_check_branch
          %932 = sbr.rel (%p930) target = $region44
        $region43: #{feature_expansion_mlp.1} parent=39 // pred_region
          %s933 = smul.u32 10, %s16
          %s934 = ssub.s32 38, %s933
          %p935 = scmp.lt.s32.totalorder %s934, 10
          %s936 = scalar_select %p935, %s934, 10
          %s937 = smul.u32 128, %s936
          %s938 = smul.u32 %s937, 4
          %p939 = scmp.ne.s32.totalorder 0, %s938
          %s940 = smul.addr %s933, 4
          %s941 = smul.addr %s940, 8
          %s942 = scalar_lea.vmem %s5, %s941
          // Predicated region
          $region45: #{feature_expansion_mlp.1} parent=43 // pred_check
            %p943 = pneg %p939
          $region46: #{feature_expansion_mlp.1} parent=43 // pred_check_branch
            %945 = sbr.rel (%p943) target = $region48
          $region47: #{feature_expansion_mlp.1} parent=43 // pred_region
            // Predicated region
            $region49: #{feature_expansion_mlp.1} parent=47 // pred_check
              _
            $region50: #{feature_expansion_mlp.1} parent=47 // pred_check_branch
              %947 = sbr.rel (0) target = $region52
            $region51: #{feature_expansion_mlp.1} parent=47 // pred_region
              %s948 = sdiv.u32.pop %s936, 10
              %s949 = srem.u32.pop %s936, 10
              // While loop
              $region53: #{feature_expansion_mlp.1} parent=51 // loop_pre_header
                _
              $region54: #{feature_expansion_mlp.1} parent=51 // loop_header
                %s951 = sphi 0, %s953
                %p952 = scmp.ge.s32.totalorder %s951, %s948
                %s956 = sphi 0, %s1041
                %s957 = sphi %s929, %s1044
                %s958 = sphi %s942, %s1045
              $region55: #{feature_expansion_mlp.1} parent=51 // loop_header_branch
                %955 = sbr.rel (%p952) target = $region59
              $region56: #{feature_expansion_mlp.1} parent=51 // loop_body
                %v959 = vld [vmem:[%s957] sm:$0xff]
                %960 = vst [vmem:[%s958] sm:$0xff] %v959
                %v961 = vld [vmem:[%s957 + $0x20] sm:$0xff]
                %962 = vst [vmem:[%s958 + $0x20] sm:$0xff] %v961
                %v963 = vld [vmem:[%s957 + $0x40] sm:$0xff]
                %964 = vst [vmem:[%s958 + $0x40] sm:$0xff] %v963
                %v965 = vld [vmem:[%s957 + $0x60] sm:$0xff]
                %966 = vst [vmem:[%s958 + $0x60] sm:$0xff] %v965
                %v967 = vld [vmem:[%s957 + $0x80] sm:$0xff]
                %968 = vst [vmem:[%s958 + $0x80] sm:$0xff] %v967
                %v969 = vld [vmem:[%s957 + $0xa0] sm:$0xff]
                %970 = vst [vmem:[%s958 + $0xa0] sm:$0xff] %v969
                %v971 = vld [vmem:[%s957 + $0xc0] sm:$0xff]
                %972 = vst [vmem:[%s958 + $0xc0] sm:$0xff] %v971
                %v973 = vld [vmem:[%s957 + $0xe0] sm:$0xff]
                %974 = vst [vmem:[%s958 + $0xe0] sm:$0xff] %v973
                %v975 = vld [vmem:[%s957 + $0x100] sm:$0xff]
                %976 = vst [vmem:[%s958 + $0x100] sm:$0xff] %v975
                %v977 = vld [vmem:[%s957 + $0x120] sm:$0xff]
                %978 = vst [vmem:[%s958 + $0x120] sm:$0xff] %v977
                %v979 = vld [vmem:[%s957 + $0x8] sm:$0xff]
                %980 = vst [vmem:[%s958 + $0x8] sm:$0xff] %v979
                %v981 = vld [vmem:[%s957 + $0x28] sm:$0xff]
                %982 = vst [vmem:[%s958 + $0x28] sm:$0xff] %v981
                %v983 = vld [vmem:[%s957 + $0x48] sm:$0xff]
                %984 = vst [vmem:[%s958 + $0x48] sm:$0xff] %v983
                %v985 = vld [vmem:[%s957 + $0x68] sm:$0xff]
                %986 = vst [vmem:[%s958 + $0x68] sm:$0xff] %v985
                %v987 = vld [vmem:[%s957 + $0x88] sm:$0xff]
                %988 = vst [vmem:[%s958 + $0x88] sm:$0xff] %v987
                %v989 = vld [vmem:[%s957 + $0xa8] sm:$0xff]
                %990 = vst [vmem:[%s958 + $0xa8] sm:$0xff] %v989
                %v991 = vld [vmem:[%s957 + $0xc8] sm:$0xff]
                %992 = vst [vmem:[%s958 + $0xc8] sm:$0xff] %v991
                %v993 = vld [vmem:[%s957 + $0xe8] sm:$0xff]
                %994 = vst [vmem:[%s958 + $0xe8] sm:$0xff] %v993
                %v995 = vld [vmem:[%s957 + $0x108] sm:$0xff]
                %996 = vst [vmem:[%s958 + $0x108] sm:$0xff] %v995
                %v997 = vld [vmem:[%s957 + $0x128] sm:$0xff]
                %998 = vst [vmem:[%s958 + $0x128] sm:$0xff] %v997
                %v999 = vld [vmem:[%s957 + $0x10] sm:$0xff]
                %1000 = vst [vmem:[%s958 + $0x10] sm:$0xff] %v999
                %v1001 = vld [vmem:[%s957 + $0x30] sm:$0xff]
                %1002 = vst [vmem:[%s958 + $0x30] sm:$0xff] %v1001
                %v1003 = vld [vmem:[%s957 + $0x50] sm:$0xff]
                %1004 = vst [vmem:[%s958 + $0x50] sm:$0xff] %v1003
                %v1005 = vld [vmem:[%s957 + $0x70] sm:$0xff]
                %1006 = vst [vmem:[%s958 + $0x70] sm:$0xff] %v1005
                %v1007 = vld [vmem:[%s957 + $0x90] sm:$0xff]
                %1008 = vst [vmem:[%s958 + $0x90] sm:$0xff] %v1007
                %v1009 = vld [vmem:[%s957 + $0xb0] sm:$0xff]
                %1010 = vst [vmem:[%s958 + $0xb0] sm:$0xff] %v1009
                %v1011 = vld [vmem:[%s957 + $0xd0] sm:$0xff]
                %1012 = vst [vmem:[%s958 + $0xd0] sm:$0xff] %v1011
                %v1013 = vld [vmem:[%s957 + $0xf0] sm:$0xff]
                %1014 = vst [vmem:[%s958 + $0xf0] sm:$0xff] %v1013
                %v1015 = vld [vmem:[%s957 + $0x110] sm:$0xff]
                %1016 = vst [vmem:[%s958 + $0x110] sm:$0xff] %v1015
                %v1017 = vld [vmem:[%s957 + $0x130] sm:$0xff]
                %1018 = vst [vmem:[%s958 + $0x130] sm:$0xff] %v1017
                %v1019 = vld [vmem:[%s957 + $0x18] sm:$0xff]
                %1020 = vst [vmem:[%s958 + $0x18] sm:$0xff] %v1019
                %v1021 = vld [vmem:[%s957 + $0x38] sm:$0xff]
                %1022 = vst [vmem:[%s958 + $0x38] sm:$0xff] %v1021
                %v1023 = vld [vmem:[%s957 + $0x58] sm:$0xff]
                %1024 = vst [vmem:[%s958 + $0x58] sm:$0xff] %v1023
                %v1025 = vld [vmem:[%s957 + $0x78] sm:$0xff]
                %1026 = vst [vmem:[%s958 + $0x78] sm:$0xff] %v1025
                %v1027 = vld [vmem:[%s957 + $0x98] sm:$0xff]
                %1028 = vst [vmem:[%s958 + $0x98] sm:$0xff] %v1027
                %v1029 = vld [vmem:[%s957 + $0xb8] sm:$0xff]
                %1030 = vst [vmem:[%s958 + $0xb8] sm:$0xff] %v1029
                %v1031 = vld [vmem:[%s957 + $0xd8] sm:$0xff]
                %1032 = vst [vmem:[%s958 + $0xd8] sm:$0xff] %v1031
                %v1033 = vld [vmem:[%s957 + $0xf8] sm:$0xff]
                %1034 = vst [vmem:[%s958 + $0xf8] sm:$0xff] %v1033
                %v1035 = vld [vmem:[%s957 + $0x118] sm:$0xff]
                %1036 = vst [vmem:[%s958 + $0x118] sm:$0xff] %v1035
                %v1037 = vld [vmem:[%s957 + $0x138] sm:$0xff]
                %1038 = vst [vmem:[%s958 + $0x138] sm:$0xff] %v1037
                %s1039 = sadd.s32 1, %s956
                %p1040 = scmp.ge.s32.totalorder %s1039, %s948
                %s1041 = scalar_select %p1040, 0, %s1039
                %s1042 = smul.u32 %s1041, 320
                %s1043 = smul.u32 %s1041, 320
                %s1044 = scalar_lea.vmem %s929, %s1042 [#allocation2]
                %s1045 = scalar_lea.vmem %s942, %s1043
              $region57: #{feature_expansion_mlp.1} parent=51 // loop_footer
                %s953 = sadd.s32 %s951, 1
              $region58: #{feature_expansion_mlp.1} parent=51 // loop_footer_branch
                %950 = sbr.rel target = $region54
              $region59: #{feature_expansion_mlp.1} parent=51 // loop_exit
                _
              %s1046 = sdiv.u32.pop %s936, 10
              %s1047 = srem.u32.pop %s936, 10
              %s1048 = smul.u32 %s1046, 10
              %s1049 = smul.u32 32, %s1048
              %s1050 = scalar_lea.vmem %s929, %s1049 [#allocation2]
              %s1051 = smul.u32 32, %s1048
              %s1052 = scalar_lea.vmem %s942, %s1051
              // While loop
              $region60: #{feature_expansion_mlp.1} parent=51 // loop_pre_header
                _
              $region61: #{feature_expansion_mlp.1} parent=51 // loop_header
                %s1054 = sphi 0, %s1056
                %p1055 = scmp.ge.s32.totalorder %s1054, %s1047
                %s1059 = sphi 0, %s1072
                %s1060 = sphi %s1050, %s1075
                %s1061 = sphi %s1052, %s1076
              $region62: #{feature_expansion_mlp.1} parent=51 // loop_header_branch
                %1058 = sbr.rel (%p1055) target = $region66
              $region63: #{feature_expansion_mlp.1} parent=51 // loop_body
                %v1062 = vld [vmem:[%s1060] sm:$0xff]
                %1063 = vst [vmem:[%s1061] sm:$0xff] %v1062
                %v1064 = vld [vmem:[%s1060 + $0x8] sm:$0xff]
                %1065 = vst [vmem:[%s1061 + $0x8] sm:$0xff] %v1064
                %v1066 = vld [vmem:[%s1060 + $0x10] sm:$0xff]
                %1067 = vst [vmem:[%s1061 + $0x10] sm:$0xff] %v1066
                %v1068 = vld [vmem:[%s1060 + $0x18] sm:$0xff]
                %1069 = vst [vmem:[%s1061 + $0x18] sm:$0xff] %v1068
                %s1070 = sadd.s32 1, %s1059
                %p1071 = scmp.ge.s32.totalorder %s1070, %s1047
                %s1072 = scalar_select %p1071, 0, %s1070
                %s1073 = smul.u32 %s1072, 32
                %s1074 = smul.u32 %s1072, 32
                %s1075 = scalar_lea.vmem %s1050, %s1073 [#allocation2]
                %s1076 = scalar_lea.vmem %s1052, %s1074
              $region64: #{feature_expansion_mlp.1} parent=51 // loop_footer
                %s1056 = sadd.s32 %s1054, 1
              $region65: #{feature_expansion_mlp.1} parent=51 // loop_footer_branch
                %1053 = sbr.rel target = $region61
              $region66: #{feature_expansion_mlp.1} parent=51 // loop_exit
                _
            $region52: #{feature_expansion_mlp.1} parent=47 // pred_fallthru
              _
            // Predicated region
            $region67: #{feature_expansion_mlp.1} parent=47 // pred_check
              _
            $region68: #{feature_expansion_mlp.1} parent=47 // pred_check_branch
              %1078 = sbr.rel target = $region70
            $region69: #{feature_expansion_mlp.1} parent=47 // pred_region
              _
            $region70: #{feature_expansion_mlp.1} parent=47 // pred_fallthru
              _
          $region48: #{feature_expansion_mlp.1} parent=43 // pred_fallthru
            _
          %1079 = vnop
        $region44: #{feature_expansion_mlp.1} parent=39 // pred_fallthru
          _
      $region40: #{feature_expansion_mlp.1} parent=5 // pred_fallthru
        _
      %p1080 = scmp.le.s32.totalorder 2, %s11
      // Predicated region
      $region71: #{feature_expansion_mlp.1} parent=5 // pred_check
        %p1081 = pneg %p1080
      $region72: #{feature_expansion_mlp.1} parent=5 // pred_check_branch
        %1083 = sbr.rel (%p1081) target = $region74
      $region73: #{feature_expansion_mlp.1} parent=5 // pred_region
        %s1084 = ssub.s32 %s11, 2
        // Predicated region
        $region75: #{feature_expansion_mlp.1} parent=73 // pred_check
          %p1085 = pneg %p150
        $region76: #{feature_expansion_mlp.1} parent=73 // pred_check_branch
          %1087 = sbr.rel (%p1085) target = $region78
        $region77: #{feature_expansion_mlp.1} parent=73 // pred_region
          %s1088 = sand.u32 %s135, 1
          %s1089 = sand.u32 %s135, 1
          %s1090 = smul.addr %s1089, 320
          %s1091 = scalar_lea.vmem [#allocation2], %s1090
        $region78: #{feature_expansion_mlp.1} parent=73 // pred_fallthru
          _
      $region74: #{feature_expansion_mlp.1} parent=5 // pred_fallthru
        _
    $region6: #{feature_expansion_mlp.1} parent=1 // loop_footer
      %s15 = sadd.s32 1, %s11
    $region7: #{feature_expansion_mlp.1} parent=1 // loop_footer_branch
      %10 = sbr.rel target = $region3
    $region8: #{feature_expansion_mlp.1} parent=1 // loop_exit
      _

</llo_original>
